<compile_context>
chip_gen: v5e
topology: v5e:2x2
jax: 0.10.0
libtpu: 0.0.40
codegen_flags: <defaults>
</compile_context>

<pallas_src>
import functools

import jax
import jax.numpy as jnp
from jax.experimental import pallas as pl
from jax.experimental.pallas import tpu as pltpu


def _round_up(x, m):
    return (x + m - 1) // m * m


def _device_defaults():
    """(default row tile, vmem_limit_bytes) per TPU generation."""
    try:
        kind = jax.devices()[0].device_kind.lower()
    except Exception:
        kind = ""
    if "v7" in kind or "7x" in kind:
        # v7x: 64 MiB physical VMEM per TensorCore -> leave headroom.
        return 256, 48 * 1024 * 1024
    # v5e / v6e (and older): 128 MiB physical VMEM -> bigger tiles, higher cap.
    return 512, 100 * 1024 * 1024


def _pick_tiles(M, C, out_dim, x_itemsize, out_itemsize, tm_default, vmem_limit):
    # Row tile: biggest sensible; for small M aim for >=2 row blocks so both
    # v7x TensorCores get work through the "parallel" grid axis.
    if M >= 2 * tm_default:
        tm = tm_default
    elif M < 64:
        tm = M                                   # single full-extent block
    else:
        tm = _round_up(pl.cdiv(M, 2), 16)        # ~2 row blocks

    budget = int(0.75 * vmem_limit)
    tn = out_dim

    def working_set(tn_):
        return (2 * tm * C * x_itemsize          # x row tiles (double-buffered)
                + 2 * C * tn_ * 2                # bf16 weight slice
                + 2 * tn_ * 4                    # f32 bias slice
                + 2 * tm * tn_ * out_itemsize)   # output tiles

    # Split the output dim into lane-dense (multiple-of-128) slices only when
    # the resident weight + tiles would blow the VMEM budget (large-C case).
    while working_set(tn) > budget and tn > 512:
        tn = _round_up(pl.cdiv(tn, 2), 128)
    while working_set(tn) > budget and tm > 64:
        tm = _round_up(pl.cdiv(tm, 2), 16)
    return tm, tn


def _qkv_fused_kernel(x_ref, w_ref, b_ref, o_ref):
    # x_ref: (TM, C) in x.dtype     -> cast to bf16 in-kernel (VPU, no extra HBM pass)
    # w_ref: (C, TN) bf16           -> W + A@B folded, VMEM-resident slice
    # b_ref: (1, TN) f32
    # o_ref: (TM, TN) out dtype
    x = x_ref[...].astype(w_ref.dtype)
    acc = jnp.dot(x, w_ref[...], preferred_element_type=jnp.float32)
    acc = acc + b_ref[...]                        # broadcast bias over rows (f32)
    o_ref[...] = acc.astype(o_ref.dtype)


def prepare_lora_qkv_weights(w_qkv, b_qkv, lora_a, lora_b,
                             compute_dtype=jnp.bfloat16):
    """Fold the LoRA delta into the base weight.  Call ONCE at model load.

    w_qkv: (C, 3C)  (pre-transposed so out = x @ W + b)
    lora_a: (C, r), lora_b: (r, 3C), b_qkv: (3C,)
    Returns (w_fused bf16 (C, 3C), bias f32 (1, 3C)).
    """
    w_fused = (w_qkv.astype(jnp.float32)
               + lora_a.astype(jnp.float32) @ lora_b.astype(jnp.float32))
    return w_fused.astype(compute_dtype), b_qkv.reshape(1, -1).astype(jnp.float32)


@functools.partial(jax.jit, static_argnames=("out_dtype",))
def lora_qkv_apply(x, w_fused, bias2d, *, out_dtype=None):
    """x: (B, N, C); w_fused: (C, 3C) bf16; bias2d: (1, 3C) f32."""
    B, N, C = x.shape
    out_dim = w_fused.shape[1]
    M = B * N
    out_dtype = x.dtype if out_dtype is None else out_dtype

    tm_default, vmem_limit = _device_defaults()
    tm, tn = _pick_tiles(M, C, out_dim,
                         jnp.dtype(x.dtype).itemsize,
                         jnp.dtype(out_dtype).itemsize,
                         tm_default, vmem_limit)
    gm = pl.cdiv(M, tm)
    gn = pl.cdiv(out_dim, tn)

    x2d = x.reshape(M, C)      # free reshape; no cast / pad pass over x

    out = pl.pallas_call(
        _qkv_fused_kernel,
        out_shape=jax.ShapeDtypeStruct((M, out_dim), out_dtype),
        grid_spec=pltpu.PrefetchScalarGridSpec(
            num_scalar_prefetch=0,
            # N-axis outer (usually 1) so the weight slice stays VMEM-resident
            # across the inner row sweep; M-axis inner, partial tail block OK.
            grid=(gn, gm),
            in_specs=[
                pl.BlockSpec((tm, C), lambda j, i: (i, 0)),   # x row tile
                pl.BlockSpec((C, tn), lambda j, i: (0, j)),   # fused weight slice
                pl.BlockSpec((1, tn), lambda j, i: (0, j)),   # bias slice
            ],
            out_specs=pl.BlockSpec((tm, tn), lambda j, i: (i, j)),
        ),
        compiler_params=pltpu.CompilerParams(
            dimension_semantics=("parallel", "parallel"),
            vmem_limit_bytes=vmem_limit,
        ),
    )(x2d, w_fused, bias2d)

    return out.reshape(B, N, out_dim)


def lora_qkv(x, w_qkv, b_qkv, lora_a, lora_b, *, out_dtype=None):
    """Convenience drop-in matching the module signature (prefers calling
    prepare_lora_qkv_weights once and lora_qkv_apply per step)."""
    w_fused, bias2d = prepare_lora_qkv_weights(w_qkv, b_qkv, lora_a, lora_b)
    return lora_qkv_apply(x, w_fused, bias2d, out_dtype=out_dtype)


if __name__ == "__main__":
    # Small shapes consistent with the module: dim=C, qkv out=3C, LoRA rank r.
    # M = B*N is deliberately NOT a tile multiple to exercise the partial tail.
    B, N, C, r = 2, 200, 128, 4
    out_dim = 3 * C

    key = jax.random.PRNGKey(0)
    kx, kw, kb, ka, kb2 = jax.random.split(key, 5)

    x = jax.random.normal(kx, (B, N, C), dtype=jnp.float32)
    # Linear weights stored pre-transposed: out = x @ W + b.
    w_qkv = jax.random.normal(kw, (C, out_dim), dtype=jnp.float32) * 0.02
    b_qkv = jax.random.normal(kb, (out_dim,), dtype=jnp.float32) * 0.01
    lora_a = jax.random.normal(ka, (C, r), dtype=jnp.float32) * 0.1
    lora_b = jax.random.normal(kb2, (r, out_dim), dtype=jnp.float32) * 0.1

    # Weight preparation hoisted out of the hot path (do once at model load).
    w_fused, bias2d = prepare_lora_qkv_weights(w_qkv, b_qkv, lora_a, lora_b)
    w_fused, bias2d = jax.block_until_ready((w_fused, bias2d))

    out = lora_qkv_apply(x, w_fused, bias2d)
    out = jax.block_until_ready(out)
    assert out.shape == (B, N, out_dim)
    assert out.dtype == x.dtype

    M = B * N
    # Reference 1: same bf16-input / f32-accumulate numerics as the kernel.
    x_bf = x.reshape(M, C).astype(jnp.bfloat16)
    ref_bf16 = (jnp.dot(x_bf, w_fused, preferred_element_type=jnp.float32)
                + bias2d).reshape(B, N, out_dim)
    assert jnp.allclose(out, ref_bf16, atol=1e-2, rtol=1e-2), float(
        jnp.max(jnp.abs(out - ref_bf16)))

    # Reference 2: exact f32 module semantics (loose tolerance for bf16 weights).
    xf = x.reshape(M, C)
    ref_f32 = (xf @ w_qkv + b_qkv[None, :]
               + (xf @ lora_a) @ lora_b).reshape(B, N, out_dim)
    assert jnp.allclose(out, ref_f32, atol=5e-2, rtol=5e-2), float(
        jnp.max(jnp.abs(out - ref_f32)))

    print("KERNEL_OK")
</pallas_src>

<mosaic_0001>
module attributes {stable_mosaic.version = 11 : i64} {
  func.func @_qkv_fused_kernel(%arg0: i32, %arg1: i32, %arg2: memref<208x128xf32, #tpu.memory_space<vmem>>, %arg3: memref<128x384xbf16, #tpu.memory_space<vmem>>, %arg4: memref<1x384xf32, #tpu.memory_space<vmem>>, %arg5: memref<208x384xf32, #tpu.memory_space<vmem>>) attributes {dimension_semantics = [#tpu.dimension_semantics<parallel>, #tpu.dimension_semantics<parallel>], iteration_bounds = array<i64: 1, 2>, scalar_prefetch = 0 : i64, scratch_operands = 0 : i64, tpu.core_type = #tpu.core_type<tc>, window_params = [{transform_indices = @transform_0, window_bounds = array<i64: 208, 128>}, {transform_indices = @transform_1, window_bounds = array<i64: 128, 384>}, {transform_indices = @transform_2, window_bounds = array<i64: 1, 384>}, {transform_indices = @transform_3, window_bounds = array<i64: 208, 384>}]} {
    %c0 = arith.constant 0 : index
    %c0_0 = arith.constant 0 : index
    %0 = vector.load %arg2[%c0, %c0_0] : memref<208x128xf32, #tpu.memory_space<vmem>>, vector<208x128xf32>
    %1 = arith.truncf %0 : vector<208x128xf32> to vector<208x128xbf16>
    %c0_1 = arith.constant 0 : index
    %c0_2 = arith.constant 0 : index
    %2 = vector.load %arg3[%c0_1, %c0_2] : memref<128x384xbf16, #tpu.memory_space<vmem>>, vector<128x384xbf16>
    %cst = arith.constant dense<0.000000e+00> : vector<208x384xf32>
    %3 = tpu.matmul %1, %2, %cst {dimension_numbers = #tpu.dot_dimension_numbers<[1], [0], [0], [1], [0, 0, 1, 1], [], []>} : vector<208x128xbf16>, vector<128x384xbf16>, vector<208x384xf32> -> vector<208x384xf32>
    %c0_3 = arith.constant 0 : index
    %c0_4 = arith.constant 0 : index
    %4 = vector.load %arg4[%c0_3, %c0_4] : memref<1x384xf32, #tpu.memory_space<vmem>>, vector<1x384xf32>
    %5 = vector.broadcast %4 : vector<1x384xf32> to vector<208x384xf32>
    %6 = arith.addf %3, %5 : vector<208x384xf32>
    %c0_5 = arith.constant 0 : index
    %c0_6 = arith.constant 0 : index
    %7 = vector.load %arg5[%c0_5, %c0_6] : memref<208x384xf32, #tpu.memory_space<vmem>>, vector<208x384xf32>
    tpu.vector_store %arg5[%c0_5, %c0_6], %6 {strides = array<i32>} : memref<208x384xf32, #tpu.memory_space<vmem>>, vector<208x384xf32>,
    return
  }
  func.func @transform_0(%arg0: i32, %arg1: i32) -> (i32, i32) {
    %c0_i32 = arith.constant 0 : i32
    %c0_i32_0 = arith.constant 0 : i32
    return %arg1, %c0_i32 : i32, i32
  }
  func.func @transform_1(%arg0: i32, %arg1: i32) -> (i32, i32) {
    %c0_i32 = arith.constant 0 : i32
    %c0_i32_0 = arith.constant 0 : i32
    return %c0_i32, %arg0 : i32, i32
  }
  func.func @transform_2(%arg0: i32, %arg1: i32) -> (i32, i32) {
    %c0_i32 = arith.constant 0 : i32
    %c0_i32_0 = arith.constant 0 : i32
    return %c0_i32, %arg0 : i32, i32
  }
  func.func @transform_3(%arg0: i32, %arg1: i32) -> (i32, i32) {
    %c0_i32 = arith.constant 0 : i32
    return %arg1, %arg0 : i32, i32
  }
}

</mosaic_0001>

<llo_original>
// kernel: lora_qkv_apply.1
$region0: #{lora_qkv_apply.1}
  #allocation0 [shape = 'u32[]', space=smem, size = 0x4, offset = 0x4, fixed_abs, tag = 'smem constant byte address 0x4 - core index']
  #allocation1 [shape = 'u32[72,128]{1,0:T(1,128)}', space=vmem, size = 0x9000, scoped, tag = 'internal scratch']
  %s0 = inlined_call_operand.hbm [shape: f32[400,128], index: 0, kind: input, shape index: {}]
  %s1 = inlined_call_operand.hbm [shape: bf16[128,384], index: 1, kind: input, shape index: {}]
  %s2 = inlined_call_operand.hbm [shape: f32[1,384], index: 2, kind: input, shape index: {}]
  %s3 = inlined_call_operand.hbm [shape: f32[400,384], index: 3, kind: output, shape index: {}]
  %s4 = sld [smem:[#allocation0]]
  $region57: #{lora_qkv_apply.1} parent=0
    _
  %s6 = ssub.s32 1, %s4
  %s7 = scalar_select 0, %s6, %s4
  $region1: #{lora_qkv_apply.1} parent=0
    #allocation2 [shape = 'u8[212992]{0}', space=vmem, size = 0x34000, scoped, tag = 'input window, operand 0']
    #allocation3 [shape = 's32[2]{0}', space=sflag, size = 0x8, scoped, tag = 'scoped memory for lora_qkv_apply.1']
    #allocation4 [shape = 's32[2]{0}', space=sflag, size = 0x8, scoped, tag = 'scoped memory for lora_qkv_apply.1']
    #allocation5 [shape = 'u8[98304]{0}', space=vmem, size = 0x18000, scoped, tag = 'input window, operand 1, single buffered']
    #allocation6 [shape = 's32[1]{0}', space=sflag, size = 0x4, scoped, tag = 'scoped memory for lora_qkv_apply.1']
    #allocation7 [shape = 'u8[1536]{0}', space=vmem, size = 0x800, scoped, tag = 'input window, operand 2, single buffered']
    #allocation8 [shape = 'u8[638976]{0}', space=vmem, size = 0x9c000, scoped, tag = 'output window, operand 0']
    %8 = vsyncpa [#allocation3], 0
    %s9 = scalar_lea.sflag [#allocation3], 1
    %10 = vsyncpa %s9, 0
    %11 = vsyncpa [#allocation6], 0
    %12 = vsyncpa [#allocation4], 0
    %s13 = scalar_lea.sflag [#allocation4], 1
    %14 = vsyncpa %s13, 0
    loop: start=0, step=1, limit=4
    $region2: #{lora_qkv_apply.1} parent=1 // loop_pre_header
      _
    $region3: #{lora_qkv_apply.1} parent=1 // loop_header
      %s16 = sphi 0, %s20
      %p17 = scmp.ge.s32.totalorder %s16, 4
      %s23 = sphi 0, %s35
      %s24 = sphi 0, %s31
      %s25 = sphi 0, %s23
      %s26 = sphi 0, %s24
      %s27 = sphi 0, %s25
      %s28 = sphi 0, %s26
      %s38 = sphi 0, %s40
      %s41 = sphi 0, %s38
      %s42 = sphi 0, %s41
      %s58 = sphi 0, %s42
      %s64 = sphi 0, %s66
      %s67 = sphi 0, %s64
      %s68 = sphi 0, %s67
      %s84 = sphi 0, %s68
      %s90 = sphi 0, %s92
      %s93 = sphi 0, %s90
      %s94 = sphi 0, %s93
      %s110 = sphi 0, %s94
      %s118 = sphi 0, %s120
      %s121 = sphi 0, %s118
      %s122 = sphi 0, %s121
      %s138 = sphi 0, %s122
    $region4: #{lora_qkv_apply.1} parent=1 // loop_header_branch
      %19 = sbr.rel (%p17) target = $region8
    $region5: #{lora_qkv_apply.1} parent=1 // loop_body
      %s21 = ssub.s32 %s16, 1
      %s22 = ssub.s32 %s16, 2
      %s29 = sadd.s32 1, %s24
      %p30 = scmp.ge.s32.totalorder %s29, 2
      %s31 = scalar_select %p30, 0, %s29
      %s32 = sadd.s32 1, %s23
      %s33 = scalar_select %p30, %s32, %s23
      %p34 = scmp.ge.s32.totalorder %s33, 1
      %s35 = scalar_select %p34, 0, %s33
      %s36 = ssub.s32 %s24, %s31
      %p37 = scmp.eq.s32.totalorder %s36, 0
      %s39 = sadd.s32 %s38, 1
      %s40 = scalar_select %p37, %s38, %s39
      %p43 = pneg %p37
      %p44 = scmp.eq.s32.totalorder %s16, 1
      %p45 = por %p43, %p44
      %p46 = scmp.ne.s32.totalorder %s38, %s41
      %p47 = scmp.eq.s32.totalorder %s16, 0
      %p48 = por %p46, %p47
      %p49 = scmp.ne.s32.totalorder %s38, %s41
      %p50 = scmp.eq.s32.totalorder %s21, 1
      %p51 = por %p49, %p50
      %p52 = scmp.ne.s32.totalorder %s41, %s42
      %p53 = scmp.eq.s32.totalorder %s21, 0
      %p54 = por %p52, %p53
      %p55 = scmp.ne.s32.totalorder %s41, %s42
      %p56 = scmp.eq.s32.totalorder %s22, 1
      %p57 = por %p55, %p56
      %p59 = scmp.ne.s32.totalorder %s42, %s58
      %p60 = scmp.eq.s32.totalorder %s22, 0
      %p61 = por %p59, %p60
      %s62 = ssub.s32 %s23, %s35
      %p63 = scmp.eq.s32.totalorder %s62, 0
      %s65 = sadd.s32 %s64, 1
      %s66 = scalar_select %p63, %s64, %s65
      %p69 = pneg %p63
      %p70 = scmp.eq.s32.totalorder %s16, 1
      %p71 = por %p69, %p70
      %p72 = scmp.ne.s32.totalorder %s64, %s67
      %p73 = scmp.eq.s32.totalorder %s16, 0
      %p74 = por %p72, %p73
      %p75 = scmp.ne.s32.totalorder %s64, %s67
      %p76 = scmp.eq.s32.totalorder %s21, 1
      %p77 = por %p75, %p76
      %p78 = scmp.ne.s32.totalorder %s67, %s68
      %p79 = scmp.eq.s32.totalorder %s21, 0
      %p80 = por %p78, %p79
      %p81 = scmp.ne.s32.totalorder %s67, %s68
      %p82 = scmp.eq.s32.totalorder %s22, 1
      %p83 = por %p81, %p82
      %p85 = scmp.ne.s32.totalorder %s68, %s84
      %p86 = scmp.eq.s32.totalorder %s22, 0
      %p87 = por %p85, %p86
      %s88 = ssub.s32 %s23, %s35
      %p89 = scmp.eq.s32.totalorder %s88, 0
      %s91 = sadd.s32 %s90, 1
      %s92 = scalar_select %p89, %s90, %s91
      %p95 = pneg %p89
      %p96 = scmp.eq.s32.totalorder %s16, 1
      %p97 = por %p95, %p96
      %p98 = scmp.ne.s32.totalorder %s90, %s93
      %p99 = scmp.eq.s32.totalorder %s16, 0
      %p100 = por %p98, %p99
      %p101 = scmp.ne.s32.totalorder %s90, %s93
      %p102 = scmp.eq.s32.totalorder %s21, 1
      %p103 = por %p101, %p102
      %p104 = scmp.ne.s32.totalorder %s93, %s94
      %p105 = scmp.eq.s32.totalorder %s21, 0
      %p106 = por %p104, %p105
      %p107 = scmp.ne.s32.totalorder %s93, %s94
      %p108 = scmp.eq.s32.totalorder %s22, 1
      %p109 = por %p107, %p108
      %p111 = scmp.ne.s32.totalorder %s94, %s110
      %p112 = scmp.eq.s32.totalorder %s22, 0
      %p113 = por %p111, %p112
      %s114 = ssub.s32 %s24, %s31
      %s115 = ssub.s32 %s23, %s35
      %s116 = sor.u32 %s114, %s115
      %p117 = scmp.eq.s32.totalorder %s116, 0
      %s119 = sadd.s32 %s118, 1
      %s120 = scalar_select %p117, %s118, %s119
      %p123 = pneg %p117
      %p124 = scmp.eq.s32.totalorder %s16, 1
      %p125 = por %p123, %p124
      %p126 = scmp.ne.s32.totalorder %s118, %s121
      %p127 = scmp.eq.s32.totalorder %s16, 0
      %p128 = por %p126, %p127
      %p129 = scmp.ne.s32.totalorder %s118, %s121
      %p130 = scmp.eq.s32.totalorder %s21, 1
      %p131 = por %p129, %p130
      %p132 = scmp.ne.s32.totalorder %s121, %s122
      %p133 = scmp.eq.s32.totalorder %s21, 0
      %p134 = por %p132, %p133
      %p135 = scmp.ne.s32.totalorder %s121, %s122
      %p136 = scmp.eq.s32.totalorder %s22, 1
      %p137 = por %p135, %p136
      %p139 = scmp.ne.s32.totalorder %s122, %s138
      %p140 = scmp.eq.s32.totalorder %s22, 0
      %p141 = por %p139, %p140
      %p142 = scmp.le.s32.totalorder 1, %s16
      %p143 = scmp.lt.s32.totalorder %s16, 3
      %p144 = pnand %p142, %p143
      %p145 = pneg %p144
      // Predicated region
      $region9: #{lora_qkv_apply.1} parent=5 // pred_check
        _
      $region10: #{lora_qkv_apply.1} parent=5 // pred_check_branch
        %147 = sbr.rel (%p144) target = $region12
      $region11: #{lora_qkv_apply.1} parent=5 // pred_region
        %s148 = ssub.s32 %s16, 1
        // Predicated region
        $region13: #{lora_qkv_apply.1} parent=11 // pred_check
          %p149 = pneg %p80
        $region14: #{lora_qkv_apply.1} parent=11 // pred_check_branch
          %151 = sbr.rel (%p149) target = $region16
        $region15: #{lora_qkv_apply.1} parent=11 // pred_region
          %s152 = smul.u32 3, %s25
          %154 = vsyncadd [#allocation6], 0
          %s155 = smul.addr %s152, 4
          %s156 = scalar_lea.hbm %s1, %s155
          %s157 = sshll.u32 %s156, 4
          %s158 = int_to_ptr.hbm [resolvable:$true] %s157
          %s159 = sshll.u32 [#allocation5], 4
          %s160 = int_to_ptr.vmem [resolvable:$true] %s159
          %165 = dma.hbm_to_vmem [thread:$0]  %s158, 3072, %s160, [#allocation6], 192, 192, 12
        $region16: #{lora_qkv_apply.1} parent=11 // pred_fallthru
          _
        // Predicated region
        $region17: #{lora_qkv_apply.1} parent=11 // pred_check
          %p166 = pneg %p106
        $region18: #{lora_qkv_apply.1} parent=11 // pred_check_branch
          %168 = sbr.rel (%p166) target = $region20
        $region19: #{lora_qkv_apply.1} parent=11 // pred_region
          %s169 = smul.u32 3, %s25
          %171 = vsyncadd [#allocation6], 0
          %s172 = scalar_lea.hbm %s2, %s169
          %s174 = sshll.u32 %s172, 4
          %s175 = int_to_ptr.hbm [resolvable:$true] %s174
          %s176 = sshll.u32 [#allocation7], 4
          %s177 = int_to_ptr.vmem [resolvable:$true] %s176
          %179 = dma.hbm_to_vmem [thread:$0]  %s175, 48, %s177, [#allocation6]
        $region20: #{lora_qkv_apply.1} parent=11 // pred_fallthru
          _
      $region12: #{lora_qkv_apply.1} parent=5 // pred_fallthru
        _
      %p180 = scmp.lt.s32.totalorder %s16, 2
      // Predicated region
      $region21: #{lora_qkv_apply.1} parent=5 // pred_check
        %p181 = pneg %p180
      $region22: #{lora_qkv_apply.1} parent=5 // pred_check_branch
        %183 = sbr.rel (%p181) target = $region24
      $region23: #{lora_qkv_apply.1} parent=5 // pred_region
        // Predicated region
        $region25: #{lora_qkv_apply.1} parent=23 // pred_check
          %p184 = pneg %p48
        $region26: #{lora_qkv_apply.1} parent=23 // pred_check_branch
          %186 = sbr.rel (%p184) target = $region28
        $region27: #{lora_qkv_apply.1} parent=23 // pred_region
          %s187 = sand.u32 %s38, 1
          %s188 = scalar_lea.sflag [#allocation3], %s187
          %s189 = sand.u32 %s38, 1
          %s190 = smul.addr %s189, 208
          %s191 = scalar_lea.vmem [#allocation2], %s190
          %s192 = smul.u32 26, %s24
          %s193 = ssub.s32 50, %s192
          %p194 = scmp.lt.s32.totalorder %s193, 26
          %s195 = scalar_select %p194, %s193, 26
          %s196 = smul.u32 8, %s195
          %s197 = ssub.s32 208, %s196
          %s198 = sshll.u32 %s197, 4
          %199 = vsyncadd %s188, %s198
          %p200 = scmp.ne.s32.totalorder 0, %s196
          %s201 = smul.addr %s192, 8
          %s202 = scalar_lea.hbm %s0, %s201
          %s203 = smul.u32 8, %s195
          %s204 = sshll.u32 %s202, 4
          %s205 = int_to_ptr.hbm [resolvable:$true] %s204
          %s206 = sshll.u32 %s191, 4
          %s207 = int_to_ptr.vmem [resolvable:$true] %s206
          %s208 = sshll.u32 %s203, 4
          %212 = dma.hbm_to_vmem [thread:$0]  (%p200), %s205, %s208, %s207, %s188, 128, 128, 8
        $region28: #{lora_qkv_apply.1} parent=23 // pred_fallthru
          _
      $region24: #{lora_qkv_apply.1} parent=5 // pred_fallthru
        _
      %p213 = scmp.le.s32.totalorder 1, %s16
      %p214 = scmp.lt.s32.totalorder %s16, 3
      %p215 = pnand %p213, %p214
      %p216 = pneg %p215
      // Predicated region
      $region29: #{lora_qkv_apply.1} parent=5 // pred_check
        _
      $region30: #{lora_qkv_apply.1} parent=5 // pred_check_branch
        %218 = sbr.rel (%p215) target = $region32
      $region31: #{lora_qkv_apply.1} parent=5 // pred_region
        %s219 = ssub.s32 %s16, 1
        %s220 = sand.u32 %s41, 1
        %s221 = scalar_lea.sflag [#allocation3], %s220
        %s222 = sand.u32 %s41, 1
        %s223 = smul.addr %s222, 208
        %s224 = scalar_lea.vmem [#allocation2], %s223
        // Predicated region
        $region33: #{lora_qkv_apply.1} parent=31 // pred_check
          %p225 = pneg %p54
        $region34: #{lora_qkv_apply.1} parent=31 // pred_check_branch
          %227 = sbr.rel (%p225) target = $region36
        $region35: #{lora_qkv_apply.1} parent=31 // pred_region
          %229 = dma.done %s221, 3328
        $region36: #{lora_qkv_apply.1} parent=31 // pred_fallthru
          _
        // Predicated region
        $region37: #{lora_qkv_apply.1} parent=31 // pred_check
          %p230 = pneg %p80
        $region38: #{lora_qkv_apply.1} parent=31 // pred_check_branch
          %232 = sbr.rel (%p230) target = $region40
        $region39: #{lora_qkv_apply.1} parent=31 // pred_region
          %234 = dma.done [#allocation6], 3072
        $region40: #{lora_qkv_apply.1} parent=31 // pred_fallthru
          _
        // Predicated region
        $region41: #{lora_qkv_apply.1} parent=31 // pred_check
          %p235 = pneg %p106
        $region42: #{lora_qkv_apply.1} parent=31 // pred_check_branch
          %237 = sbr.rel (%p235) target = $region44
        $region43: #{lora_qkv_apply.1} parent=31 // pred_region
          %239 = dma.done [#allocation6], 48
        $region44: #{lora_qkv_apply.1} parent=31 // pred_fallthru
          _
        %s240 = sand.u32 %s41, 1
        %s241 = scalar_lea.sflag [#allocation3], %s240
        %s242 = sand.u32 %s41, 1
        %s243 = smul.addr %s242, 208
        %s244 = scalar_lea.vmem [#allocation2], %s243
        %p245 = pneg %p54
        %p246 = pneg %p51
        %p247 = pneg %p80
        %p248 = pneg %p77
        %p249 = pneg %p106
        %p250 = pneg %p103
        %p251 = pneg %p134
        %p252 = pneg %p131
        %s253 = sand.u32 %s121, 1
        %s254 = scalar_lea.sflag [#allocation4], %s253
        %s255 = sand.u32 %s121, 1
        %s256 = smul.addr %s255, 624
        %s257 = scalar_lea.vmem [#allocation8], %s256
        %s258 = smul.u32 26, %s26
        %s259 = ssub.s32 50, %s258
        %p260 = scmp.lt.s32.totalorder %s259, 26
        %s261 = scalar_select %p260, %s259, 26
        %s262 = smul.u32 8, %s261
        %s263 = smul.u32 3, %s25
        %s264 = smul.u32 3, %s25
        %s265 = smul.u32 26, %s26
        %s266 = smul.u32 3, %s25
        %s267 = ssub.s32 50, %s265
        %p268 = scmp.lt.s32.totalorder %s267, 26
        %s269 = scalar_select %p268, %s267, 26
        %s270 = smul.u32 8, %s269
        %s271 = smul.u32 %s270, 3
        %v272 = vld [vmem:[%s224] sm:$0xff]
        %v273 = vld [vmem:[%s224 + $0x8] sm:$0xff]
        %v274 = vld [vmem:[%s224 + $0x10] sm:$0xff]
        %v275 = vld [vmem:[%s224 + $0x18] sm:$0xff]
        %v276 = vld [vmem:[%s224 + $0x20] sm:$0xff]
        %v277 = vld [vmem:[%s224 + $0x28] sm:$0xff]
        %v278 = vld [vmem:[%s224 + $0x30] sm:$0xff]
        %v279 = vld [vmem:[%s224 + $0x38] sm:$0xff]
        %v280 = vld [vmem:[%s224 + $0x40] sm:$0xff]
        %v281 = vld [vmem:[%s224 + $0x48] sm:$0xff]
        %v282 = vld [vmem:[%s224 + $0x50] sm:$0xff]
        %v283 = vld [vmem:[%s224 + $0x58] sm:$0xff]
        %v284 = vld [vmem:[%s224 + $0x60] sm:$0xff]
        %v285 = vld [vmem:[%s224 + $0x68] sm:$0xff]
        %v286 = vld [vmem:[%s224 + $0x70] sm:$0xff]
        %v287 = vld [vmem:[%s224 + $0x78] sm:$0xff]
        %v288 = vld [vmem:[%s224 + $0x80] sm:$0xff]
        %v289 = vld [vmem:[%s224 + $0x88] sm:$0xff]
        %v290 = vld [vmem:[%s224 + $0x90] sm:$0xff]
        %v291 = vld [vmem:[%s224 + $0x98] sm:$0xff]
        %v292 = vld [vmem:[%s224 + $0xa0] sm:$0xff]
        %v293 = vld [vmem:[%s224 + $0xa8] sm:$0xff]
        %v294 = vld [vmem:[%s224 + $0xb0] sm:$0xff]
        %v295 = vld [vmem:[%s224 + $0xb8] sm:$0xff]
        %v296 = vld [vmem:[%s224 + $0xc0] sm:$0xff]
        %v297 = vld [vmem:[%s224 + $0xc8] sm:$0xff]
        %v298 = vpack.c.bf16 %v273, %v272
        %v299 = vpack.c.bf16 %v275, %v274
        %v300 = vpack.c.bf16 %v277, %v276
        %v301 = vpack.c.bf16 %v279, %v278
        %v302 = vpack.c.bf16 %v281, %v280
        %v303 = vpack.c.bf16 %v283, %v282
        %v304 = vpack.c.bf16 %v285, %v284
        %v305 = vpack.c.bf16 %v287, %v286
        %v306 = vpack.c.bf16 %v289, %v288
        %v307 = vpack.c.bf16 %v291, %v290
        %v308 = vpack.c.bf16 %v293, %v292
        %v309 = vpack.c.bf16 %v295, %v294
        %v310 = vpack.c.bf16 %v297, %v296
        %v311 = vld [vmem:[#allocation5] sm:$0xff]
        %v312 = vld [vmem:[#allocation5 + $0x8] sm:$0xf]
        %v313 = vld [vmem:[#allocation5 + $0xc] sm:$0xff]
        %v314 = vld [vmem:[#allocation5 + $0x14] sm:$0xf]
        %v315 = vld [vmem:[#allocation5 + $0x18] sm:$0xff]
        %v316 = vld [vmem:[#allocation5 + $0x20] sm:$0xf]
        %v317 = vld [vmem:[#allocation5 + $0x24] sm:$0xff]
        %v318 = vld [vmem:[#allocation5 + $0x2c] sm:$0xf]
        %v319 = vld [vmem:[#allocation5 + $0x30] sm:$0xff]
        %v320 = vld [vmem:[#allocation5 + $0x38] sm:$0xf]
        %v321 = vld [vmem:[#allocation5 + $0x3c] sm:$0xff]
        %v322 = vld [vmem:[#allocation5 + $0x44] sm:$0xf]
        %v323 = vld [vmem:[#allocation5 + $0x48] sm:$0xff]
        %v324 = vld [vmem:[#allocation5 + $0x50] sm:$0xf]
        %v325 = vld [vmem:[#allocation5 + $0x54] sm:$0xff]
        %v326 = vld [vmem:[#allocation5 + $0x5c] sm:$0xf]
        %v327 = vld [vmem:[#allocation5 + $0x60] sm:$0xff]
        %v328 = vld [vmem:[#allocation5 + $0x68] sm:$0xf]
        %v329 = vld [vmem:[#allocation5 + $0x6c] sm:$0xff]
        %v330 = vld [vmem:[#allocation5 + $0x74] sm:$0xf]
        %v331 = vld [vmem:[#allocation5 + $0x78] sm:$0xff]
        %v332 = vld [vmem:[#allocation5 + $0x80] sm:$0xf]
        %v333 = vld [vmem:[#allocation5 + $0x84] sm:$0xff]
        %v334 = vld [vmem:[#allocation5 + $0x8c] sm:$0xf]
        %v335 = vld [vmem:[#allocation5 + $0x90] sm:$0xff]
        %v336 = vld [vmem:[#allocation5 + $0x98] sm:$0xf]
        %v337 = vld [vmem:[#allocation5 + $0x9c] sm:$0xff]
        %v338 = vld [vmem:[#allocation5 + $0xa4] sm:$0xf]
        %v339 = vld [vmem:[#allocation5 + $0xa8] sm:$0xff]
        %v340 = vld [vmem:[#allocation5 + $0xb0] sm:$0xf]
        %v341 = vld [vmem:[#allocation5 + $0xb4] sm:$0xff]
        %v342 = vld [vmem:[#allocation5 + $0xbc] sm:$0xf]
        %v343 = vld [vmem:[#allocation7] sm:$0x7]
        %v345 = vperm.slane %v343, 0
        %v346 = vperm.slane %v343, 1
        %v347 = vperm.slane %v343, 2
        %v383 = vunpack.c.l.b16 %v311
        %v384 = vunpack.c.h.b16 %v311
        %v385 = vunpack.c.l.b16 %v312
        %v386 = vunpack.c.l.b16 %v313
        %v387 = vunpack.c.h.b16 %v313
        %v388 = vunpack.c.l.b16 %v314
        %v389 = vunpack.c.l.b16 %v315
        %v390 = vunpack.c.h.b16 %v315
        %v391 = vunpack.c.l.b16 %v316
        %v392 = vunpack.c.l.b16 %v317
        %v393 = vunpack.c.h.b16 %v317
        %v394 = vunpack.c.l.b16 %v318
        %v395 = vunpack.c.l.b16 %v319
        %v396 = vunpack.c.h.b16 %v319
        %v397 = vunpack.c.l.b16 %v320
        %v398 = vunpack.c.l.b16 %v321
        %v399 = vunpack.c.h.b16 %v321
        %v400 = vunpack.c.l.b16 %v322
        %v401 = vunpack.c.l.b16 %v323
        %v402 = vunpack.c.h.b16 %v323
        %v403 = vunpack.c.l.b16 %v324
        %v404 = vunpack.c.l.b16 %v325
        %v405 = vunpack.c.h.b16 %v325
        %v406 = vunpack.c.l.b16 %v326
        %v407 = vunpack.c.l.b16 %v327
        %v408 = vunpack.c.h.b16 %v327
        %v409 = vunpack.c.l.b16 %v328
        %v410 = vunpack.c.l.b16 %v329
        %v411 = vunpack.c.h.b16 %v329
        %v412 = vunpack.c.l.b16 %v330
        %v413 = vunpack.c.l.b16 %v331
        %v414 = vunpack.c.h.b16 %v331
        %v415 = vunpack.c.l.b16 %v332
        %v416 = vunpack.c.l.b16 %v333
        %v417 = vunpack.c.h.b16 %v333
        %v418 = vunpack.c.l.b16 %v334
        %v419 = vunpack.c.l.b16 %v335
        %v420 = vunpack.c.h.b16 %v335
        %v421 = vunpack.c.l.b16 %v336
        %v422 = vunpack.c.l.b16 %v337
        %v423 = vunpack.c.h.b16 %v337
        %v424 = vunpack.c.l.b16 %v338
        %v425 = vunpack.c.l.b16 %v339
        %v426 = vunpack.c.h.b16 %v339
        %v427 = vunpack.c.l.b16 %v340
        %v428 = vunpack.c.l.b16 %v341
        %v429 = vunpack.c.h.b16 %v341
        %v430 = vunpack.c.l.b16 %v342
        %v431 = vpack.c.b16 %v386, %v383
        %v432 = vpack.c.b16 %v387, %v384
        %v433 = vpack.c.b16 %v388, %v385
        %v434 = vpack.c.b16 %v392, %v389
        %v435 = vpack.c.b16 %v393, %v390
        %v436 = vpack.c.b16 %v394, %v391
        %v437 = vpack.c.b16 %v398, %v395
        %v438 = vpack.c.b16 %v399, %v396
        %v439 = vpack.c.b16 %v400, %v397
        %v440 = vpack.c.b16 %v404, %v401
        %v441 = vpack.c.b16 %v405, %v402
        %v442 = vpack.c.b16 %v406, %v403
        %v443 = vpack.c.b16 %v410, %v407
        %v444 = vpack.c.b16 %v411, %v408
        %v445 = vpack.c.b16 %v412, %v409
        %v446 = vpack.c.b16 %v416, %v413
        %v447 = vpack.c.b16 %v417, %v414
        %v448 = vpack.c.b16 %v418, %v415
        %v449 = vpack.c.b16 %v422, %v419
        %v450 = vpack.c.b16 %v423, %v420
        %v451 = vpack.c.b16 %v424, %v421
        %v452 = vpack.c.b16 %v428, %v425
        %v453 = vpack.c.b16 %v429, %v426
        %v454 = vpack.c.b16 %v430, %v427
        %479 = vmatpush.bf16.msra.mxu0 %v452
        %480 = vmatpush.bf16.msra.mxu0 %v449
        %481 = vmatpush.bf16.msra.mxu0 %v446
        %482 = vmatpush.bf16.msra.mxu0 %v443
        %483 = vmatpush.bf16.msra.mxu0 %v440
        %484 = vmatpush.bf16.msra.mxu0 %v437
        %485 = vmatpush.bf16.msra.mxu0 %v434
        %486 = vmatpush.bf16.msra.mxu0 %v431
        %487 = vmatmul.bf16.gmra.mxu0 %v298
        %v488 = vpop.f32.mrf.mxu0
        %v489 = vadd.f32 %v345, %v488
        %v490 = vpop.f32.mrf.mxu0
        %v491 = vadd.f32 %v345, %v490
        %492 = vmatmul.bf16.gmra.mxu0 %v299
        %v493 = vpop.f32.mrf.mxu0
        %v494 = vadd.f32 %v345, %v493
        %v495 = vpop.f32.mrf.mxu0
        %v496 = vadd.f32 %v345, %v495
        %497 = vmatmul.bf16.gmra.mxu0 %v300
        %v498 = vpop.f32.mrf.mxu0
        %v499 = vadd.f32 %v345, %v498
        %v500 = vpop.f32.mrf.mxu0
        %v501 = vadd.f32 %v345, %v500
        %502 = vmatmul.bf16.gmra.mxu0 %v301
        %v503 = vpop.f32.mrf.mxu0
        %v504 = vadd.f32 %v345, %v503
        %v505 = vpop.f32.mrf.mxu0
        %v506 = vadd.f32 %v345, %v505
        %507 = vmatmul.bf16.gmra.mxu0 %v302
        %v508 = vpop.f32.mrf.mxu0
        %v509 = vadd.f32 %v345, %v508
        %v510 = vpop.f32.mrf.mxu0
        %v511 = vadd.f32 %v345, %v510
        %512 = vmatmul.bf16.gmra.mxu0 %v303
        %v513 = vpop.f32.mrf.mxu0
        %v514 = vadd.f32 %v345, %v513
        %v515 = vpop.f32.mrf.mxu0
        %v516 = vadd.f32 %v345, %v515
        %517 = vmatmul.bf16.gmra.mxu0 %v304
        %v518 = vpop.f32.mrf.mxu0
        %v519 = vadd.f32 %v345, %v518
        %v520 = vpop.f32.mrf.mxu0
        %v521 = vadd.f32 %v345, %v520
        %522 = vmatmul.bf16.gmra.mxu0 %v305
        %v523 = vpop.f32.mrf.mxu0
        %v524 = vadd.f32 %v345, %v523
        %v525 = vpop.f32.mrf.mxu0
        %v526 = vadd.f32 %v345, %v525
        %527 = vmatmul.bf16.gmra.mxu0 %v306
        %v528 = vpop.f32.mrf.mxu0
        %v529 = vadd.f32 %v345, %v528
        %v530 = vpop.f32.mrf.mxu0
        %v531 = vadd.f32 %v345, %v530
        %532 = vmatmul.bf16.gmra.mxu0 %v307
        %v533 = vpop.f32.mrf.mxu0
        %v534 = vadd.f32 %v345, %v533
        %v535 = vpop.f32.mrf.mxu0
        %v536 = vadd.f32 %v345, %v535
        %537 = vmatmul.bf16.gmra.mxu0 %v308
        %v538 = vpop.f32.mrf.mxu0
        %v539 = vadd.f32 %v345, %v538
        %v540 = vpop.f32.mrf.mxu0
        %v541 = vadd.f32 %v345, %v540
        %542 = vmatmul.bf16.gmra.mxu0 %v309
        %v543 = vpop.f32.mrf.mxu0
        %v544 = vadd.f32 %v345, %v543
        %v545 = vpop.f32.mrf.mxu0
        %v546 = vadd.f32 %v345, %v545
        %547 = vmatmul.bf16.gmra.mxu0 %v310
        %v548 = vpop.f32.mrf.mxu0
        %v549 = vadd.f32 %v345, %v548
        %v550 = vpop.f32.mrf.mxu0
        %v551 = vadd.f32 %v345, %v550
        %552 = vdwg.mxu0
        %553 = vmatpush.bf16.msra.mxu0 %v453
        %554 = vmatpush.bf16.msra.mxu0 %v450
        %555 = vmatpush.bf16.msra.mxu0 %v447
        %556 = vmatpush.bf16.msra.mxu0 %v444
        %557 = vmatpush.bf16.msra.mxu0 %v441
        %558 = vmatpush.bf16.msra.mxu0 %v438
        %559 = vmatpush.bf16.msra.mxu0 %v435
        %560 = vmatpush.bf16.msra.mxu0 %v432
        %561 = vmatmul.bf16.gmra.mxu0 %v298
        %v562 = vpop.f32.mrf.mxu0
        %v563 = vadd.f32 %v346, %v562
        %v564 = vpop.f32.mrf.mxu0
        %v565 = vadd.f32 %v346, %v564
        %566 = vmatmul.bf16.gmra.mxu0 %v299
        %v567 = vpop.f32.mrf.mxu0
        %v568 = vadd.f32 %v346, %v567
        %v569 = vpop.f32.mrf.mxu0
        %v570 = vadd.f32 %v346, %v569
        %571 = vmatmul.bf16.gmra.mxu0 %v300
        %v572 = vpop.f32.mrf.mxu0
        %v573 = vadd.f32 %v346, %v572
        %v574 = vpop.f32.mrf.mxu0
        %v575 = vadd.f32 %v346, %v574
        %576 = vmatmul.bf16.gmra.mxu0 %v301
        %v577 = vpop.f32.mrf.mxu0
        %v578 = vadd.f32 %v346, %v577
        %v579 = vpop.f32.mrf.mxu0
        %v580 = vadd.f32 %v346, %v579
        %581 = vmatmul.bf16.gmra.mxu0 %v302
        %v582 = vpop.f32.mrf.mxu0
        %v583 = vadd.f32 %v346, %v582
        %v584 = vpop.f32.mrf.mxu0
        %v585 = vadd.f32 %v346, %v584
        %586 = vmatmul.bf16.gmra.mxu0 %v303
        %v587 = vpop.f32.mrf.mxu0
        %v588 = vadd.f32 %v346, %v587
        %v589 = vpop.f32.mrf.mxu0
        %v590 = vadd.f32 %v346, %v589
        %591 = vmatmul.bf16.gmra.mxu0 %v304
        %v592 = vpop.f32.mrf.mxu0
        %v593 = vadd.f32 %v346, %v592
        %v594 = vpop.f32.mrf.mxu0
        %v595 = vadd.f32 %v346, %v594
        %596 = vmatmul.bf16.gmra.mxu0 %v305
        %v597 = vpop.f32.mrf.mxu0
        %v598 = vadd.f32 %v346, %v597
        %v599 = vpop.f32.mrf.mxu0
        %v600 = vadd.f32 %v346, %v599
        %601 = vmatmul.bf16.gmra.mxu0 %v306
        %v602 = vpop.f32.mrf.mxu0
        %v603 = vadd.f32 %v346, %v602
        %v604 = vpop.f32.mrf.mxu0
        %v605 = vadd.f32 %v346, %v604
        %606 = vmatmul.bf16.gmra.mxu0 %v307
        %v607 = vpop.f32.mrf.mxu0
        %v608 = vadd.f32 %v346, %v607
        %v609 = vpop.f32.mrf.mxu0
        %v610 = vadd.f32 %v346, %v609
        %611 = vmatmul.bf16.gmra.mxu0 %v308
        %v612 = vpop.f32.mrf.mxu0
        %v613 = vadd.f32 %v346, %v612
        %v614 = vpop.f32.mrf.mxu0
        %v615 = vadd.f32 %v346, %v614
        %616 = vmatmul.bf16.gmra.mxu0 %v309
        %v617 = vpop.f32.mrf.mxu0
        %v618 = vadd.f32 %v346, %v617
        %v619 = vpop.f32.mrf.mxu0
        %v620 = vadd.f32 %v346, %v619
        %621 = vmatmul.bf16.gmra.mxu0 %v310
        %v622 = vpop.f32.mrf.mxu0
        %v623 = vadd.f32 %v346, %v622
        %v624 = vpop.f32.mrf.mxu0
        %v625 = vadd.f32 %v346, %v624
        %626 = vdwg.mxu0
        %627 = vmatpush.bf16.msra.mxu0 %v454
        %628 = vmatpush.bf16.msra.mxu0 %v451
        %629 = vmatpush.bf16.msra.mxu0 %v448
        %630 = vmatpush.bf16.msra.mxu0 %v445
        %631 = vmatpush.bf16.msra.mxu0 %v442
        %632 = vmatpush.bf16.msra.mxu0 %v439
        %633 = vmatpush.bf16.msra.mxu0 %v436
        %634 = vmatpush.bf16.msra.mxu0 %v433
        %635 = vmatmul.bf16.gmra.mxu0 %v298
        %v636 = vpop.f32.mrf.mxu0
        %v637 = vadd.f32 %v347, %v636
        %v638 = vpop.f32.mrf.mxu0
        %v639 = vadd.f32 %v347, %v638
        %640 = vmatmul.bf16.gmra.mxu0 %v299
        %v641 = vpop.f32.mrf.mxu0
        %v642 = vadd.f32 %v347, %v641
        %v643 = vpop.f32.mrf.mxu0
        %v644 = vadd.f32 %v347, %v643
        %645 = vmatmul.bf16.gmra.mxu0 %v300
        %v646 = vpop.f32.mrf.mxu0
        %v647 = vadd.f32 %v347, %v646
        %v648 = vpop.f32.mrf.mxu0
        %v649 = vadd.f32 %v347, %v648
        %650 = vmatmul.bf16.gmra.mxu0 %v301
        %v651 = vpop.f32.mrf.mxu0
        %v652 = vadd.f32 %v347, %v651
        %v653 = vpop.f32.mrf.mxu0
        %v654 = vadd.f32 %v347, %v653
        %655 = vmatmul.bf16.gmra.mxu0 %v302
        %v656 = vpop.f32.mrf.mxu0
        %v657 = vadd.f32 %v347, %v656
        %v658 = vpop.f32.mrf.mxu0
        %v659 = vadd.f32 %v347, %v658
        %660 = vmatmul.bf16.gmra.mxu0 %v303
        %v661 = vpop.f32.mrf.mxu0
        %v662 = vadd.f32 %v347, %v661
        %v663 = vpop.f32.mrf.mxu0
        %v664 = vadd.f32 %v347, %v663
        %665 = vmatmul.bf16.gmra.mxu0 %v304
        %v666 = vpop.f32.mrf.mxu0
        %v667 = vadd.f32 %v347, %v666
        %v668 = vpop.f32.mrf.mxu0
        %v669 = vadd.f32 %v347, %v668
        %670 = vmatmul.bf16.gmra.mxu0 %v305
        %v671 = vpop.f32.mrf.mxu0
        %v672 = vadd.f32 %v347, %v671
        %v673 = vpop.f32.mrf.mxu0
        %v674 = vadd.f32 %v347, %v673
        %675 = vmatmul.bf16.gmra.mxu0 %v306
        %v676 = vpop.f32.mrf.mxu0
        %v677 = vadd.f32 %v347, %v676
        %v678 = vpop.f32.mrf.mxu0
        %v679 = vadd.f32 %v347, %v678
        %680 = vmatmul.bf16.gmra.mxu0 %v307
        %v681 = vpop.f32.mrf.mxu0
        %v682 = vadd.f32 %v347, %v681
        %v683 = vpop.f32.mrf.mxu0
        %v684 = vadd.f32 %v347, %v683
        %685 = vmatmul.bf16.gmra.mxu0 %v308
        %v686 = vpop.f32.mrf.mxu0
        %v687 = vadd.f32 %v347, %v686
        %v688 = vpop.f32.mrf.mxu0
        %v689 = vadd.f32 %v347, %v688
        %690 = vmatmul.bf16.gmra.mxu0 %v309
        %v691 = vpop.f32.mrf.mxu0
        %v692 = vadd.f32 %v347, %v691
        %v693 = vpop.f32.mrf.mxu0
        %v694 = vadd.f32 %v347, %v693
        %695 = vmatmul.bf16.gmra.mxu0 %v310
        %v696 = vpop.f32.mrf.mxu0
        %v697 = vadd.f32 %v347, %v696
        %v698 = vpop.f32.mrf.mxu0
        %v699 = vadd.f32 %v347, %v698
        %700 = vdwg.mxu0
        %701 = vst [vmem:[%s257] sm:$0xff] %v489
        %702 = vst [vmem:[%s257 + $0x8] sm:$0xff] %v563
        %703 = vst [vmem:[%s257 + $0x10] sm:$0xff] %v637
        %704 = vst [vmem:[%s257 + $0x18] sm:$0xff] %v491
        %705 = vst [vmem:[%s257 + $0x20] sm:$0xff] %v565
        %706 = vst [vmem:[%s257 + $0x28] sm:$0xff] %v639
        %707 = vst [vmem:[%s257 + $0x30] sm:$0xff] %v494
        %708 = vst [vmem:[%s257 + $0x38] sm:$0xff] %v568
        %709 = vst [vmem:[%s257 + $0x40] sm:$0xff] %v642
        %710 = vst [vmem:[%s257 + $0x48] sm:$0xff] %v496
        %711 = vst [vmem:[%s257 + $0x50] sm:$0xff] %v570
        %712 = vst [vmem:[%s257 + $0x58] sm:$0xff] %v644
        %713 = vst [vmem:[%s257 + $0x60] sm:$0xff] %v499
        %714 = vst [vmem:[%s257 + $0x68] sm:$0xff] %v573
        %715 = vst [vmem:[%s257 + $0x70] sm:$0xff] %v647
        %716 = vst [vmem:[%s257 + $0x78] sm:$0xff] %v501
        %717 = vst [vmem:[%s257 + $0x80] sm:$0xff] %v575
        %718 = vst [vmem:[%s257 + $0x88] sm:$0xff] %v649
        %719 = vst [vmem:[%s257 + $0x90] sm:$0xff] %v504
        %720 = vst [vmem:[%s257 + $0x98] sm:$0xff] %v578
        %721 = vst [vmem:[%s257 + $0xa0] sm:$0xff] %v652
        %722 = vst [vmem:[%s257 + $0xa8] sm:$0xff] %v506
        %723 = vst [vmem:[%s257 + $0xb0] sm:$0xff] %v580
        %724 = vst [vmem:[%s257 + $0xb8] sm:$0xff] %v654
        %725 = vst [vmem:[%s257 + $0xc0] sm:$0xff] %v509
        %726 = vst [vmem:[%s257 + $0xc8] sm:$0xff] %v583
        %727 = vst [vmem:[%s257 + $0xd0] sm:$0xff] %v657
        %728 = vst [vmem:[%s257 + $0xd8] sm:$0xff] %v511
        %729 = vst [vmem:[%s257 + $0xe0] sm:$0xff] %v585
        %730 = vst [vmem:[%s257 + $0xe8] sm:$0xff] %v659
        %731 = vst [vmem:[%s257 + $0xf0] sm:$0xff] %v514
        %732 = vst [vmem:[%s257 + $0xf8] sm:$0xff] %v588
        %733 = vst [vmem:[%s257 + $0x100] sm:$0xff] %v662
        %734 = vst [vmem:[%s257 + $0x108] sm:$0xff] %v516
        %735 = vst [vmem:[%s257 + $0x110] sm:$0xff] %v590
        %736 = vst [vmem:[%s257 + $0x118] sm:$0xff] %v664
        %737 = vst [vmem:[%s257 + $0x120] sm:$0xff] %v519
        %738 = vst [vmem:[%s257 + $0x128] sm:$0xff] %v593
        %739 = vst [vmem:[%s257 + $0x130] sm:$0xff] %v667
        %740 = vst [vmem:[%s257 + $0x138] sm:$0xff] %v521
        %741 = vst [vmem:[%s257 + $0x140] sm:$0xff] %v595
        %742 = vst [vmem:[%s257 + $0x148] sm:$0xff] %v669
        %743 = vst [vmem:[%s257 + $0x150] sm:$0xff] %v524
        %744 = vst [vmem:[%s257 + $0x158] sm:$0xff] %v598
        %745 = vst [vmem:[%s257 + $0x160] sm:$0xff] %v672
        %746 = vst [vmem:[%s257 + $0x168] sm:$0xff] %v526
        %747 = vst [vmem:[%s257 + $0x170] sm:$0xff] %v600
        %748 = vst [vmem:[%s257 + $0x178] sm:$0xff] %v674
        %749 = vst [vmem:[%s257 + $0x180] sm:$0xff] %v529
        %750 = vst [vmem:[%s257 + $0x188] sm:$0xff] %v603
        %751 = vst [vmem:[%s257 + $0x190] sm:$0xff] %v677
        %752 = vst [vmem:[%s257 + $0x198] sm:$0xff] %v531
        %753 = vst [vmem:[%s257 + $0x1a0] sm:$0xff] %v605
        %754 = vst [vmem:[%s257 + $0x1a8] sm:$0xff] %v679
        %755 = vst [vmem:[%s257 + $0x1b0] sm:$0xff] %v534
        %756 = vst [vmem:[%s257 + $0x1b8] sm:$0xff] %v608
        %757 = vst [vmem:[%s257 + $0x1c0] sm:$0xff] %v682
        %758 = vst [vmem:[%s257 + $0x1c8] sm:$0xff] %v536
        %759 = vst [vmem:[%s257 + $0x1d0] sm:$0xff] %v610
        %760 = vst [vmem:[%s257 + $0x1d8] sm:$0xff] %v684
        %761 = vst [vmem:[%s257 + $0x1e0] sm:$0xff] %v539
        %762 = vst [vmem:[%s257 + $0x1e8] sm:$0xff] %v613
        %763 = vst [vmem:[%s257 + $0x1f0] sm:$0xff] %v687
        %764 = vst [vmem:[%s257 + $0x1f8] sm:$0xff] %v541
        %765 = vst [vmem:[%s257 + $0x200] sm:$0xff] %v615
        %766 = vst [vmem:[%s257 + $0x208] sm:$0xff] %v689
        %767 = vst [vmem:[%s257 + $0x210] sm:$0xff] %v544
        %768 = vst [vmem:[%s257 + $0x218] sm:$0xff] %v618
        %769 = vst [vmem:[%s257 + $0x220] sm:$0xff] %v692
        %770 = vst [vmem:[%s257 + $0x228] sm:$0xff] %v546
        %771 = vst [vmem:[%s257 + $0x230] sm:$0xff] %v620
        %772 = vst [vmem:[%s257 + $0x238] sm:$0xff] %v694
        %773 = vst [vmem:[%s257 + $0x240] sm:$0xff] %v549
        %774 = vst [vmem:[%s257 + $0x248] sm:$0xff] %v623
        %775 = vst [vmem:[%s257 + $0x250] sm:$0xff] %v697
        %776 = vst [vmem:[%s257 + $0x258] sm:$0xff] %v551
        %777 = vst [vmem:[%s257 + $0x260] sm:$0xff] %v625
        %778 = vst [vmem:[%s257 + $0x268] sm:$0xff] %v699
        %s779 = sand.u32 %s121, 1
        %s780 = scalar_lea.sflag [#allocation4], %s779
        %s781 = sand.u32 %s121, 1
        %s782 = smul.addr %s781, 624
        %s783 = scalar_lea.vmem [#allocation8], %s782
        // Predicated region
        $region45: #{lora_qkv_apply.1} parent=31 // pred_check
          %p784 = pneg %p131
        $region46: #{lora_qkv_apply.1} parent=31 // pred_check_branch
          %786 = sbr.rel (%p784) target = $region48
        $region47: #{lora_qkv_apply.1} parent=31 // pred_region
          %s787 = smul.u32 26, %s26
          %s788 = smul.u32 3, %s25
          %s789 = ssub.s32 50, %s787
          %p790 = scmp.lt.s32.totalorder %s789, 26
          %s791 = scalar_select %p790, %s789, 26
          %s792 = smul.u32 8, %s791
          %s793 = smul.u32 %s792, 3
          %s794 = ssub.s32 624, %s793
          %s795 = sshll.u32 %s794, 4
          %796 = vsyncadd %s780, %s795
          %p797 = scmp.ne.s32.totalorder 0, %s793
          %s798 = smul.addr %s787, 3
          %s799 = sadd.s32 %s788, %s798
          %s800 = smul.addr %s799, 8
          %s801 = scalar_lea.hbm %s3, %s800
          %s802 = smul.u32 24, %s791
          %s803 = sshll.u32 %s783, 4
          %s804 = int_to_ptr.vmem [resolvable:$true] %s803
          %s805 = sshll.u32 %s801, 4
          %s806 = int_to_ptr.hbm [resolvable:$true] %s805
          %s807 = sshll.u32 %s802, 4
          %811 = dma.vmem_to_hbm [thread:$0]  (%p797), %s804, %s807, %s806, %s780, 384, 384, 24
        $region48: #{lora_qkv_apply.1} parent=31 // pred_fallthru
          _
      $region32: #{lora_qkv_apply.1} parent=5 // pred_fallthru
        _
      %p812 = scmp.le.s32.totalorder 2, %s16
      // Predicated region
      $region49: #{lora_qkv_apply.1} parent=5 // pred_check
        %p813 = pneg %p812
      $region50: #{lora_qkv_apply.1} parent=5 // pred_check_branch
        %815 = sbr.rel (%p813) target = $region52
      $region51: #{lora_qkv_apply.1} parent=5 // pred_region
        %s816 = ssub.s32 %s16, 2
        // Predicated region
        $region53: #{lora_qkv_apply.1} parent=51 // pred_check
          %p817 = pneg %p137
        $region54: #{lora_qkv_apply.1} parent=51 // pred_check_branch
          %819 = sbr.rel (%p817) target = $region56
        $region55: #{lora_qkv_apply.1} parent=51 // pred_region
          %s820 = sand.u32 %s122, 1
          %s821 = scalar_lea.sflag [#allocation4], %s820
          %s822 = sand.u32 %s122, 1
          %s823 = smul.addr %s822, 624
          %s824 = scalar_lea.vmem [#allocation8], %s823
          %826 = dma.done %s821, 9984
        $region56: #{lora_qkv_apply.1} parent=51 // pred_fallthru
          _
      $region52: #{lora_qkv_apply.1} parent=5 // pred_fallthru
        _
    $region6: #{lora_qkv_apply.1} parent=1 // loop_footer
      %s20 = sadd.s32 1, %s16
    $region7: #{lora_qkv_apply.1} parent=1 // loop_footer_branch
      %15 = sbr.rel target = $region3
    $region8: #{lora_qkv_apply.1} parent=1 // loop_exit
      _
    %827 = vsyncpa [#allocation3], 1
    %s828 = scalar_lea.sflag [#allocation3], 1
    %829 = vsyncpa %s828, 1
    %830 = vsyncpa [#allocation6], 1
    %831 = vsyncpa [#allocation4], 1
    %s832 = scalar_lea.sflag [#allocation4], 1
    %833 = vsyncpa %s832, 1

</llo_original>
